<compile_context>
chip_gen: v7x
topology: tpu7x:2x2x1
jax: 0.10.0
libtpu: 0.0.40
codegen_flags: <defaults>
</compile_context>

<pallas_src>
import functools

import jax
import jax.numpy as jnp
from jax.experimental import pallas as pl
from jax.experimental.pallas import tpu as pltpu


def _round_up(x, m):
    return (x + m - 1) // m * m


def rbf_kernel(x_ref, ct_ref, ls_ref, o_ref, acc_ref):
    """Computes one (tb, tc) output tile, accumulating over the K grid axis.

    x_ref:   (tb, tk)  f32  input tile
    ct_ref:  (tk, tc)  f32  centers, pre-transposed to (D, C)
    ls_ref:  (1,  tc)  f32  log_sigmas row for this center tile
    o_ref:   (tb, tc)  f32  output tile
    acc_ref: (tb, tc)  f32  VMEM scratch: running squared distance
    """
    k = pl.program_id(2)

    @pl.when(k == 0)
    def _():
        acc_ref[...] = jnp.zeros_like(acc_ref)

    x = x_ref[...]                                         # (tb, tk)
    ct = ct_ref[...]                                       # (tk, tc)
    # ||x - c||^2 = ||x||^2 + ||c||^2 - 2 x.c ; the dominant term is an MXU GEMM.
    acc_ref[...] += (
        jnp.sum(x * x, axis=1, keepdims=True)              # (tb, 1)
        + jnp.sum(ct * ct, axis=0, keepdims=True)          # (1, tc)
        - 2.0 * jnp.dot(x, ct, preferred_element_type=jnp.float32)
    )

    @pl.when(k == pl.num_programs(2) - 1)
    def _():
        # -1 / (2 sigma^2) = -0.5 * exp(-2 * log_sigma): one small EUP exp,
        # then a single VPU multiply per output element (no divide).
        scale = -0.5 * jnp.exp(-2.0 * ls_ref[...])         # (1, tc)
        dist = jnp.maximum(acc_ref[...], 0.0)              # guard cancellation
        o_ref[...] = jnp.exp(dist * scale)


@functools.partial(jax.jit, static_argnames=("tb", "tc", "tk"))
def rbf_layer(x, centers, log_sigmas, *, tb=256, tc=256, tk=512):
    """x: (B, D), centers: (C, D), log_sigmas: (C,) -> (B, C), float32."""
    B, D = x.shape
    C, _ = centers.shape

    # Lane/sublane-aligned tiles, clamped to the padded problem size.
    tb = min(tb, _round_up(B, 8))       # sublane axis of x / out
    tc = min(tc, _round_up(C, 128))     # lane axis of out (lane-dense stores)
    tk = min(tk, _round_up(D, 128))     # contraction tile
    Bp, Cp, Dp = _round_up(B, tb), _round_up(C, tc), _round_up(D, tk)

    # Zero padding is exact: zero features contribute nothing to distances,
    # and padded batch rows / center columns are sliced off below.
    xf = x.astype(jnp.float32)
    cf = centers.astype(jnp.float32)
    xp = jnp.pad(xf, ((0, Bp - B), (0, Dp - D)))
    cp = jnp.pad(cf, ((0, Cp - C), (0, Dp - D)))
    ct = cp.T                                              # (Dp, Cp) pre-transposed
    ls = jnp.pad(log_sigmas.astype(jnp.float32), (0, Cp - C)).reshape(1, Cp)

    grid = (Bp // tb, Cp // tc, Dp // tk)

    out = pl.pallas_call(
        rbf_kernel,
        out_shape=jax.ShapeDtypeStruct((Bp, Cp), jnp.float32),
        grid_spec=pltpu.PrefetchScalarGridSpec(
            num_scalar_prefetch=0,
            grid=grid,
            in_specs=[
                pl.BlockSpec((tb, tk), lambda i, j, k: (i, k)),
                pl.BlockSpec((tk, tc), lambda i, j, k: (k, j)),
                pl.BlockSpec((1, tc), lambda i, j, k: (0, j)),
            ],
            out_specs=pl.BlockSpec((tb, tc), lambda i, j, k: (i, j)),
            scratch_shapes=[pltpu.VMEM((tb, tc), jnp.float32)],
        ),
        compiler_params=pltpu.CompilerParams(
            dimension_semantics=("parallel", "parallel", "arbitrary"),
        ),
        cost_estimate=pl.CostEstimate(
            flops=2 * Bp * Cp * Dp,
            transcendentals=Bp * Cp,
            bytes_accessed=4 * (Bp * Dp + Dp * Cp + Cp + Bp * Cp),
        ),
    )(xp, ct, ls)

    return out[:B, :C]


def rbf_reference(x, centers, log_sigmas):
    diff = x[:, None, :] - centers[None, :, :]
    distances = jnp.sum(diff * diff, axis=-1)
    sigmas = jnp.exp(log_sigmas)[None, :]
    return jnp.exp(-distances / (2.0 * sigmas * sigmas))


if __name__ == "__main__":
    key = jax.random.PRNGKey(0)
    k_x, k_c = jax.random.split(key)

    batch = 8
    input_dim = 32
    num_centers = 16

    # Deterministic parameter init mirroring the module's __init__:
    #   centers ~ uniform[0,1) (torch.rand), log_sigmas = zeros.
    centers = jax.random.uniform(k_c, (num_centers, input_dim), dtype=jnp.float32)
    log_sigmas = jnp.zeros((num_centers,), dtype=jnp.float32)

    x = jax.random.normal(k_x, (batch, input_dim), dtype=jnp.float32)

    out = jax.block_until_ready(rbf_layer(x, centers, log_sigmas))
    ref = rbf_reference(x, centers, log_sigmas)

    assert out.shape == (batch, num_centers)
    assert out.dtype == jnp.float32
    # Slightly relaxed tolerance: the Gram-matrix distance formulation can show
    # ~1e-6-level cancellation differences vs the broadcast-subtract reference.
    assert jnp.allclose(out, ref, atol=1e-4, rtol=1e-4)

    print("KERNEL_OK")
</pallas_src>

<mosaic_0001>
module attributes {stable_mosaic.version = 11 : i64} {
  func.func @rbf_kernel(%arg0: i32, %arg1: i32, %arg2: i32, %arg3: memref<8x128xf32, #tpu.memory_space<vmem>>, %arg4: memref<128x128xf32, #tpu.memory_space<vmem>>, %arg5: memref<1x128xf32, #tpu.memory_space<vmem>>, %arg6: memref<8x128xf32, #tpu.memory_space<vmem>>, %arg7: memref<8x128xf32, #tpu.memory_space<vmem>>) attributes {dimension_semantics = [#tpu.dimension_semantics<parallel>, #tpu.dimension_semantics<parallel>, #tpu.dimension_semantics<arbitrary>], iteration_bounds = array<i64: 1, 1, 1>, scalar_prefetch = 0 : i64, scratch_operands = 1 : i64, tpu.core_type = #tpu.core_type<tc>, window_params = [{transform_indices = @transform_0, window_bounds = array<i64: 8, 128>}, {transform_indices = @transform_1, window_bounds = array<i64: 128, 128>}, {transform_indices = @transform_2, window_bounds = array<i64: 1, 128>}, {transform_indices = @transform_3, window_bounds = array<i64: 8, 128>}]} {
    %c0_i32 = arith.constant 0 : i32
    %0 = arith.cmpi eq, %arg2, %c0_i32 : i32
    %1 = arith.extui %0 : i1 to i32
    %c0_i32_0 = arith.constant 0 : i32
    %2 = arith.cmpi ne, %1, %c0_i32_0 : i32
    scf.if %2 {
      %cst_13 = arith.constant 0.000000e+00 : f32
      %24 = vector.broadcast %cst_13 : f32 to vector<8x128xf32>
      %c0_14 = arith.constant 0 : index
      %c0_15 = arith.constant 0 : index
      %25 = vector.load %arg7[%c0_14, %c0_15] : memref<8x128xf32, #tpu.memory_space<vmem>>, vector<8x128xf32>
      tpu.vector_store %arg7[%c0_14, %c0_15], %24 {strides = array<i32>} : memref<8x128xf32, #tpu.memory_space<vmem>>, vector<8x128xf32>,
    } else {
    }
    %c0 = arith.constant 0 : index
    %c0_1 = arith.constant 0 : index
    %3 = vector.load %arg3[%c0, %c0_1] : memref<8x128xf32, #tpu.memory_space<vmem>>, vector<8x128xf32>
    %c0_2 = arith.constant 0 : index
    %c0_3 = arith.constant 0 : index
    %4 = vector.load %arg4[%c0_2, %c0_3] : memref<128x128xf32, #tpu.memory_space<vmem>>, vector<128x128xf32>
    %c0_4 = arith.constant 0 : index
    %c0_5 = arith.constant 0 : index
    %5 = vector.load %arg7[%c0_4, %c0_5] : memref<8x128xf32, #tpu.memory_space<vmem>>, vector<8x128xf32>
    %6 = arith.mulf %3, %3 : vector<8x128xf32>
    %cst = arith.constant dense<0.000000e+00> : vector<8xf32>
    %7 = vector.multi_reduction <add>, %6, %cst [1] : vector<8x128xf32> to vector<8xf32>
    %8 = vector.shape_cast %7 : vector<8xf32> to vector<8x1xf32>
    %9 = arith.mulf %4, %4 : vector<128x128xf32>
    %cst_6 = arith.constant dense<0.000000e+00> : vector<128xf32>
    %10 = vector.multi_reduction <add>, %9, %cst_6 [0] : vector<128x128xf32> to vector<128xf32>
    %11 = vector.shape_cast %10 : vector<128xf32> to vector<1x128xf32>
    %12 = vector.broadcast %8 : vector<8x1xf32> to vector<8x128xf32>
    %13 = vector.broadcast %11 : vector<1x128xf32> to vector<8x128xf32>
    %14 = arith.addf %12, %13 : vector<8x128xf32>
    %cst_7 = arith.constant dense<0.000000e+00> : vector<8x128xf32>
    %15 = tpu.matmul %3, %4, %cst_7 {dimension_numbers = #tpu.dot_dimension_numbers<[1], [0], [0], [1], [0, 0, 1, 1], [], []>} : vector<8x128xf32>, vector<128x128xf32>, vector<8x128xf32> -> vector<8x128xf32>
    %cst_8 = arith.constant 2.000000e+00 : f32
    %16 = vector.broadcast %cst_8 : f32 to vector<8x128xf32>
    %17 = arith.mulf %16, %15 : vector<8x128xf32>
    %18 = arith.subf %14, %17 : vector<8x128xf32>
    %19 = arith.addf %5, %18 : vector<8x128xf32>
    %c0_9 = arith.constant 0 : index
    %c0_10 = arith.constant 0 : index
    %20 = vector.load %arg7[%c0_9, %c0_10] : memref<8x128xf32, #tpu.memory_space<vmem>>, vector<8x128xf32>
    tpu.vector_store %arg7[%c0_9, %c0_10], %19 {strides = array<i32>} : memref<8x128xf32, #tpu.memory_space<vmem>>, vector<8x128xf32>,
    %c0_i32_11 = arith.constant 0 : i32
    %21 = arith.cmpi eq, %arg2, %c0_i32_11 : i32
    %22 = arith.extui %21 : i1 to i32
    %c0_i32_12 = arith.constant 0 : i32
    %23 = arith.cmpi ne, %22, %c0_i32_12 : i32
    scf.if %23 {
      %c0_13 = arith.constant 0 : index
      %c0_14 = arith.constant 0 : index
      %24 = vector.load %arg5[%c0_13, %c0_14] : memref<1x128xf32, #tpu.memory_space<vmem>>, vector<1x128xf32>
      %cst_15 = arith.constant -2.000000e+00 : f32
      %25 = vector.broadcast %cst_15 : f32 to vector<1x128xf32>
      %26 = arith.mulf %25, %24 : vector<1x128xf32>
      %27 = math.exp %26 : vector<1x128xf32>
      %cst_16 = arith.constant -5.000000e-01 : f32
      %28 = vector.broadcast %cst_16 : f32 to vector<1x128xf32>
      %29 = arith.mulf %28, %27 : vector<1x128xf32>
      %c0_17 = arith.constant 0 : index
      %c0_18 = arith.constant 0 : index
      %30 = vector.load %arg7[%c0_17, %c0_18] : memref<8x128xf32, #tpu.memory_space<vmem>>, vector<8x128xf32>
      %cst_19 = arith.constant 0.000000e+00 : f32
      %31 = vector.broadcast %cst_19 : f32 to vector<8x128xf32>
      %32 = arith.maximumf %30, %31 : vector<8x128xf32>
      %33 = vector.broadcast %29 : vector<1x128xf32> to vector<8x128xf32>
      %34 = arith.mulf %32, %33 : vector<8x128xf32>
      %35 = math.exp %34 : vector<8x128xf32>
      %c0_20 = arith.constant 0 : index
      %c0_21 = arith.constant 0 : index
      %36 = vector.load %arg6[%c0_20, %c0_21] : memref<8x128xf32, #tpu.memory_space<vmem>>, vector<8x128xf32>
      tpu.vector_store %arg6[%c0_20, %c0_21], %35 {strides = array<i32>} : memref<8x128xf32, #tpu.memory_space<vmem>>, vector<8x128xf32>,
    } else {
    }
    return
  }
  func.func @transform_0(%arg0: i32, %arg1: i32, %arg2: i32) -> (i32, i32) {
    %c0_i32 = arith.constant 0 : i32
    return %arg0, %arg2 : i32, i32
  }
  func.func @transform_1(%arg0: i32, %arg1: i32, %arg2: i32) -> (i32, i32) {
    %c0_i32 = arith.constant 0 : i32
    return %arg2, %arg1 : i32, i32
  }
  func.func @transform_2(%arg0: i32, %arg1: i32, %arg2: i32) -> (i32, i32) {
    %c0_i32 = arith.constant 0 : i32
    %c0_i32_0 = arith.constant 0 : i32
    return %c0_i32, %arg1 : i32, i32
  }
  func.func @transform_3(%arg0: i32, %arg1: i32, %arg2: i32) -> (i32, i32) {
    %c0_i32 = arith.constant 0 : i32
    return %arg0, %arg1 : i32, i32
  }
}

</mosaic_0001>

<llo_original>
// kernel: rbf_layer.1
$region0: #{rbf_layer.1}
  #allocation0 [shape = 'u32[]', space=smem, size = 0x4, offset = 0x4, fixed_abs, tag = 'smem constant byte address 0x4 - core index']
  #allocation1 [shape = 'u32[144,128]{1,0:T(1,128)}', space=vmem, size = 0x12000, scoped, tag = 'internal scratch']
  #allocation2 [shape = 'f32[8,128]{1,0:T(8,128)}', space=vmem, size = 0x1000, scoped, tag = 'scratch operand']
  %s0 = inlined_call_operand.vmem [shape: f32[8,128], index: 0, kind: input, shape index: {}]
  %s1 = inlined_call_operand.vmem [shape: f32[128,128], index: 1, kind: input, shape index: {}]
  %s2 = inlined_call_operand.vmem [shape: f32[1,128], index: 2, kind: input, shape index: {}]
  %s3 = inlined_call_operand.hbm [shape: f32[8,128], index: 3, kind: output, shape index: {}]
  %s4 = sld [smem:[#allocation0]]
  $region30: #{rbf_layer.1} parent=0
    _
  %s6 = ssub.s32 1, %s4
  %s7 = scalar_select 0, %s6, %s4
  $region1: #{rbf_layer.1} parent=0
    #allocation3 [shape = 'u8[4096]{0}', space=vmem, size = 0x1000, scoped, tag = 'output window, operand 0, single buffered']
    #allocation4 [shape = 's32[1]{0}', space=sflag, size = 0x4, scoped, tag = 'scoped memory for rbf_layer.1']
    %8 = vsyncpa [#allocation4], 0
    // Predicated region
    $region2: #{rbf_layer.1} parent=1 // pred_check
      _
    $region3: #{rbf_layer.1} parent=1 // pred_check_branch
      %10 = sbr.rel (0) target = $region5
    $region4: #{rbf_layer.1} parent=1 // pred_region
      _
    $region5: #{rbf_layer.1} parent=1 // pred_fallthru
      _
    // Predicated region
    $region6: #{rbf_layer.1} parent=1 // pred_check
      _
    $region7: #{rbf_layer.1} parent=1 // pred_check_branch
      %12 = sbr.rel (0) target = $region9
    $region8: #{rbf_layer.1} parent=1 // pred_region
      _
    $region9: #{rbf_layer.1} parent=1 // pred_fallthru
      _
    // Predicated region
    $region10: #{rbf_layer.1} parent=1 // pred_check
      _
    $region11: #{rbf_layer.1} parent=1 // pred_check_branch
      %14 = sbr.rel (0) target = $region13
    $region12: #{rbf_layer.1} parent=1 // pred_region
      _
    $region13: #{rbf_layer.1} parent=1 // pred_fallthru
      _
    %p15 = scmp.eq.s32.totalorder 0, 0
    // Predicated region
    $region14: #{rbf_layer.1} parent=1 // pred_check
      %p16 = pneg %p15
    $region15: #{rbf_layer.1} parent=1 // pred_check_branch
      %18 = sbr.rel (%p16) target = $region17
    $region16: #{rbf_layer.1} parent=1 // pred_region
      %19 = vst [vmem:[#allocation2] sm:$0xff] 0.0
    $region17: #{rbf_layer.1} parent=1 // pred_fallthru
      _
    %v20 = vld [vmem:[%s0] sm:$0xff]
    %v21 = vld [vmem:[%s1] sm:$0xff]
    %v22 = vld [vmem:[%s1 + $0x8] sm:$0xff]
    %v23 = vld [vmem:[%s1 + $0x10] sm:$0xff]
    %v24 = vld [vmem:[%s1 + $0x18] sm:$0xff]
    %v25 = vld [vmem:[%s1 + $0x20] sm:$0xff]
    %v26 = vld [vmem:[%s1 + $0x28] sm:$0xff]
    %v27 = vld [vmem:[%s1 + $0x30] sm:$0xff]
    %v28 = vld [vmem:[%s1 + $0x38] sm:$0xff]
    %v29 = vld [vmem:[%s1 + $0x40] sm:$0xff]
    %v30 = vld [vmem:[%s1 + $0x48] sm:$0xff]
    %v31 = vld [vmem:[%s1 + $0x50] sm:$0xff]
    %v32 = vld [vmem:[%s1 + $0x58] sm:$0xff]
    %v33 = vld [vmem:[%s1 + $0x60] sm:$0xff]
    %v34 = vld [vmem:[%s1 + $0x68] sm:$0xff]
    %v35 = vld [vmem:[%s1 + $0x70] sm:$0xff]
    %v36 = vld [vmem:[%s1 + $0x78] sm:$0xff]
    %v37 = vld [vmem:[#allocation2] sm:$0xff]
    %v38 = vmul.f32 %v20, %v20
    %39 = vadd.xlane.f32.xlu0 %v38
    %v40 = vpop.xlane.xlu0 %39
    %v41 = vmul.f32 %v21, %v21
    %v42 = vmul.f32 %v22, %v22
    %v43 = vmul.f32 %v23, %v23
    %v44 = vmul.f32 %v24, %v24
    %v45 = vmul.f32 %v25, %v25
    %v46 = vmul.f32 %v26, %v26
    %v47 = vmul.f32 %v27, %v27
    %v48 = vmul.f32 %v28, %v28
    %v49 = vmul.f32 %v29, %v29
    %v50 = vmul.f32 %v30, %v30
    %v51 = vmul.f32 %v31, %v31
    %v52 = vmul.f32 %v32, %v32
    %v53 = vmul.f32 %v33, %v33
    %v54 = vmul.f32 %v34, %v34
    %v55 = vmul.f32 %v35, %v35
    %v56 = vmul.f32 %v36, %v36
    %v57 = vadd.f32 %v41, %v42
    %v58 = vadd.f32 %v57, %v43
    %v59 = vadd.f32 %v58, %v44
    %v60 = vadd.f32 %v59, %v45
    %v61 = vadd.f32 %v60, %v46
    %v62 = vadd.f32 %v61, %v47
    %v63 = vadd.f32 %v62, %v48
    %v64 = vadd.f32 %v63, %v49
    %v65 = vadd.f32 %v64, %v50
    %v66 = vadd.f32 %v65, %v51
    %v67 = vadd.f32 %v66, %v52
    %v68 = vadd.f32 %v67, %v53
    %v69 = vadd.f32 %v68, %v54
    %v70 = vadd.f32 %v69, %v55
    %v71 = vadd.f32 %v70, %v56
    %v72 = vrot.slane %v71, 4
    %v73 = vadd.f32 %v71, %v72
    %v74 = vrot.slane %v73, 2
    %v75 = vadd.f32 %v73, %v74
    %v76 = vrot.slane %v75, 1
    %v77 = vadd.f32 %v75, %v76
    %v78 = vadd.f32 %v40, %v77
    %79 = vmatprep.subr.mxu0 0.0
    %80 = vmatpush1.msra.mxu0 %v21
    %81 = vmatprep.subr.mxu0 0.0
    %82 = vmatpush1.msra.mxu0 %v22
    %83 = vmatprep.subr.mxu0 0.0
    %84 = vmatpush1.msra.mxu0 %v23
    %85 = vmatprep.subr.mxu0 0.0
    %86 = vmatpush1.msra.mxu0 %v24
    %87 = vmatprep.subr.mxu0 0.0
    %88 = vmatpush1.msra.mxu0 %v25
    %89 = vmatprep.subr.mxu0 0.0
    %90 = vmatpush1.msra.mxu0 %v26
    %91 = vmatprep.subr.mxu0 0.0
    %92 = vmatpush1.msra.mxu0 %v27
    %93 = vmatprep.subr.mxu0 0.0
    %94 = vmatpush1.msra.mxu0 %v28
    %95 = vmatprep.subr.mxu0 0.0
    %96 = vmatpush1.msra.mxu0 %v29
    %97 = vmatprep.subr.mxu0 0.0
    %98 = vmatpush1.msra.mxu0 %v30
    %99 = vmatprep.subr.mxu0 0.0
    %100 = vmatpush1.msra.mxu0 %v31
    %101 = vmatprep.subr.mxu0 0.0
    %102 = vmatpush1.msra.mxu0 %v32
    %103 = vmatprep.subr.mxu0 0.0
    %104 = vmatpush1.msra.mxu0 %v33
    %105 = vmatprep.subr.mxu0 0.0
    %106 = vmatpush1.msra.mxu0 %v34
    %107 = vmatprep.subr.mxu0 0.0
    %108 = vmatpush1.msra.mxu0 %v35
    %109 = vmatprep.subr.mxu0 0.0
    %110 = vmatpush1.msra.mxu0 %v36
    %111 = vmatprep.subr.mxu0 0.0
    %112 = vmatpush1.msra.mxu0 0.0
    %113 = vmatprep.subr.mxu0 0.0
    %114 = vmatpush1.msra.mxu0 0.0
    %115 = vmatprep.subr.mxu0 0.0
    %116 = vmatpush1.msra.mxu0 0.0
    %117 = vmatprep.subr.mxu0 0.0
    %118 = vmatpush1.msra.mxu0 0.0
    %119 = vmatprep.subr.mxu0 0.0
    %120 = vmatpush1.msra.mxu0 0.0
    %121 = vmatprep.subr.mxu0 0.0
    %122 = vmatpush1.msra.mxu0 0.0
    %123 = vmatprep.subr.mxu0 0.0
    %124 = vmatpush1.msra.mxu0 0.0
    %125 = vmatprep.subr.mxu0 0.0
    %126 = vmatpush1.msra.mxu0 0.0
    %127 = vmatprep.subr.mxu0 0.0
    %128 = vmatpush1.msra.mxu0 0.0
    %129 = vmatprep.subr.mxu0 0.0
    %130 = vmatpush1.msra.mxu0 0.0
    %131 = vmatprep.subr.mxu0 0.0
    %132 = vmatpush1.msra.mxu0 0.0
    %133 = vmatprep.subr.mxu0 0.0
    %134 = vmatpush1.msra.mxu0 0.0
    %135 = vmatprep.subr.mxu0 0.0
    %136 = vmatpush1.msra.mxu0 0.0
    %137 = vmatprep.subr.mxu0 0.0
    %138 = vmatpush1.msra.mxu0 0.0
    %139 = vmatprep.subr.mxu0 0.0
    %140 = vmatpush1.msra.mxu0 0.0
    %141 = vmatprep.subr.mxu0 0.0
    %142 = vmatpush1.msra.mxu0 0.0
    %143 = vmatprep.mubr.f32.mxu0 0.0
    %144 = vmatmul.mubr.f32.gmra.mrb[0].mxu0 %v20
    %v145 = vpop.f32.mrb[0].mxu0
    %v146 = vadd.f32 0.0, %v145
    %v147 = vpop.f32.mrb[0].mxu0
    %148 = vdwg.mxu0
    %v149 = vmul.f32 %v146, 2.0
    %v150 = vsub.f32 %v78, %v149
    %v151 = vadd.f32 %v37, %v150
    %152 = vst [vmem:[#allocation2] sm:$0xff] %v151
    // Predicated region
    $region18: #{rbf_layer.1} parent=1 // pred_check
      %p153 = pneg %p15
    $region19: #{rbf_layer.1} parent=1 // pred_check_branch
      %155 = sbr.rel (%p153) target = $region21
    $region20: #{rbf_layer.1} parent=1 // pred_region
      %v156 = vld [vmem:[%s2] sm:$0x1]
      %v157 = vmul.f32 %v156, -2.0
      %v158 = vmul.f32 %v157, 1.442695
      %v159 = vpow.pop %v158
      %v160 = vmul.f32 %v159, -0.5
      %v161 = vld [vmem:[#allocation2] sm:$0xff]
      %v162 = vmax.f32 %v161, 0.0
      %v164 = vlaneseq
      %v165 = vshrl.u32 %v164, 7
      %v166 = vsub.s32 0, %v165
      %v167 = vrot.slane %v160, %v166
      %v169 = vmul.f32 %v162, %v167
      %v170 = vmul.f32 %v169, 1.442695
      %v171 = vpow.pop %v170
      %172 = vst [vmem:[#allocation3] sm:$0xff] %v171
    $region21: #{rbf_layer.1} parent=1 // pred_fallthru
      _
    // Predicated region
    $region22: #{rbf_layer.1} parent=1 // pred_check
      _
    $region23: #{rbf_layer.1} parent=1 // pred_check_branch
      %174 = sbr.rel (0) target = $region25
    $region24: #{rbf_layer.1} parent=1 // pred_region
      %s176 = ssub.s32 128, 128
      %177 = vsyncadd [#allocation4], %s176
      %s179 = sshll.u32 [#allocation3], 4
      %s180 = int_to_ptr.vmem [resolvable:$true] %s179
      %182 = dma.vmem_to_hbm [thread:$0]  %s180, 128, %s3, [#allocation4]
    $region25: #{rbf_layer.1} parent=1 // pred_fallthru
      _
    // Predicated region
    $region26: #{rbf_layer.1} parent=1 // pred_check
      _
    $region27: #{rbf_layer.1} parent=1 // pred_check_branch
      %184 = sbr.rel (0) target = $region29
    $region28: #{rbf_layer.1} parent=1 // pred_region
      %185 = dma.done [#allocation4], 128
    $region29: #{rbf_layer.1} parent=1 // pred_fallthru
      _
    %186 = vsyncpa [#allocation4], 1

</llo_original>
